<compile_context>
chip_gen: v7x
topology: tpu7x:2x2x1
jax: 0.10.0
libtpu: 0.0.40
codegen_flags: <defaults>
</compile_context>

<pallas_src>
import jax
import jax.numpy as jnp
from jax import lax
from jax.experimental import pallas as pl
from jax.experimental.pallas import tpu as pltpu


def encoder_baseline_forward(x_nchw, w_k, b):
    """x_nchw: (N, Cin, H, W) f32.  w_k: (K, K, Cin, Cout) conv weight.  b: (Cout,)."""
    N, Cin, H, W = x_nchw.shape
    K = w_k.shape[0]
    Cout = w_k.shape[-1]
    KC = K * Cin                         # contraction dim per vertical tap (12 here)
    inv_count = 1.0 / float(N * H * W)   # mean over all conv-output rows

    # ---- plain-JAX glue (layout only) ----
    x = jnp.transpose(x_nchw, (0, 2, 3, 1))                      # NCHW -> NHWC
    xp = jnp.pad(x, ((0, 0), (1, 1), (1, 1), (0, 0)))            # (N, H+2, W+2, Cin)
    # horizontal patch concat: channel index = dj*Cin + c  -> (N, H+2, W, K*Cin)
    xh = jnp.concatenate([xp[:, :, dj:dj + W, :] for dj in range(K)], axis=-1)
    xh = xh.astype(jnp.bfloat16)
    wh = w_k.reshape(K, KC, Cout).astype(jnp.bfloat16)           # (K, K*Cin, Cout)
    b2 = b.reshape(1, Cout).astype(jnp.float32)

    def kernel(xh_ref, w_ref, b_ref, o_ref, acc_ref):
        n = pl.program_id(0)

        @pl.when(n == 0)
        def _():
            acc_ref[...] = jnp.zeros_like(acc_ref)

        xi = xh_ref[0]                                           # (H+2, W, K*Cin) bf16
        # fused vertical im2col: K accumulating MXU matmuls on H-shifted slices
        conv = jnp.dot(xi[0:H].reshape(H * W, KC), w_ref[0],
                       preferred_element_type=jnp.float32)       # (H*W, Cout) f32
        for di in range(1, K):
            conv = conv + jnp.dot(xi[di:di + H].reshape(H * W, KC), w_ref[di],
                                  preferred_element_type=jnp.float32)
        feat = jnp.maximum(conv + b_ref[...], 0.0)               # bias + ReLU (f32)
        acc_ref[...] += jnp.sum(feat, axis=0, keepdims=True)     # running sum (1, Cout)

        @pl.when(n == pl.num_programs(0) - 1)
        def _():
            pooled = acc_ref[...] * inv_count                    # mean over N*H*W rows
            # F.normalize(dim=-1): x * rsqrt(max(||x||^2, eps^2)), eps = 1e-12
            ss = jnp.sum(pooled * pooled, axis=-1, keepdims=True)
            o_ref[...] = pooled * lax.rsqrt(jnp.maximum(ss, 1e-24))

    return pl.pallas_call(
        kernel,
        out_shape=jax.ShapeDtypeStruct((1, Cout), jnp.float32),
        grid=(N,),
        in_specs=[
            pl.BlockSpec((1, H + 2, W, KC), lambda n: (n, 0, 0, 0)),   # per-image block
            pl.BlockSpec((K, KC, Cout), lambda n: (0, 0, 0)),          # weight: resident
            pl.BlockSpec((1, Cout), lambda n: (0, 0)),                 # bias:   resident
        ],
        out_specs=pl.BlockSpec((1, Cout), lambda n: (0, 0)),
        scratch_shapes=[pltpu.VMEM((1, Cout), jnp.float32)],
        compiler_params=pltpu.CompilerParams(
            dimension_semantics=("arbitrary",)),                 # carried reduction axis
    )(xh, wh, b2)


def _reference_forward(x_nchw, w_k, b):
    """Pure-JAX f32 reference (same math, no Pallas) for a correctness check."""
    N, Cin, H, W = x_nchw.shape
    K = w_k.shape[0]
    Cout = w_k.shape[-1]
    x = jnp.transpose(x_nchw, (0, 2, 3, 1)).astype(jnp.float32)
    xp = jnp.pad(x, ((0, 0), (1, 1), (1, 1), (0, 0)))
    acc = jnp.zeros((N, H, W, Cout), jnp.float32)
    for di in range(K):
        for dj in range(K):
            acc = acc + jnp.einsum('nhwc,co->nhwo',
                                   xp[:, di:di + H, dj:dj + W, :], w_k[di, dj])
    feat = jnp.maximum(acc + b[None, None, None, :], 0.0)
    pooled = jnp.mean(feat, axis=(0, 1, 2))[None, :]             # (1, Cout)
    nrm = jnp.sqrt(jnp.sum(pooled * pooled, axis=-1, keepdims=True))
    return pooled / jnp.maximum(nrm, 1e-12)


if __name__ == "__main__":
    # Small shapes: batch=2, channels=4, spatial=16x16, Cout=32, kernel 3x3.
    N, Cin, H, W = 2, 4, 16, 16
    Cout, K = 32, 3

    key = jax.random.PRNGKey(0)
    kx, kw, kb = jax.random.split(key, 3)
    x = jax.random.normal(kx, (N, Cin, H, W), dtype=jnp.float32)
    fan_in = Cin * K * K
    w_k = jax.random.normal(kw, (K, K, Cin, Cout), dtype=jnp.float32) * (2.0 / fan_in) ** 0.5
    b = jax.random.normal(kb, (Cout,), dtype=jnp.float32) * 0.01

    out = encoder_baseline_forward(x, w_k, b)
    out = jax.block_until_ready(out)

    ref = _reference_forward(x, w_k, b)
    assert out.shape == (1, Cout), out.shape
    # bf16 streamed operands -> loosened tolerance vs the f32 reference.
    assert jnp.allclose(out, ref, rtol=2e-2, atol=2e-2), "mismatch vs JAX reference"

    print("KERNEL_OK")
</pallas_src>

<mosaic_0001>
module attributes {stable_mosaic.version = 11 : i64} {
  func.func @kernel(%arg0: i32, %arg1: memref<1x18x16x12xbf16, #tpu.memory_space<vmem>>, %arg2: memref<3x12x32xbf16, #tpu.memory_space<vmem>>, %arg3: memref<1x32xf32, #tpu.memory_space<vmem>>, %arg4: memref<1x32xf32, #tpu.memory_space<vmem>>, %arg5: memref<1x32xf32, #tpu.memory_space<vmem>>) attributes {dimension_semantics = [#tpu.dimension_semantics<arbitrary>], iteration_bounds = array<i64: 2>, scalar_prefetch = 0 : i64, scratch_operands = 1 : i64, tpu.core_type = #tpu.core_type<tc>, window_params = [{transform_indices = @transform_0, window_bounds = array<i64: 1, 18, 16, 12>}, {pipeline_mode = #tpu.pipeline_mode<synchronous>, transform_indices = @transform_1, window_bounds = array<i64: 3, 12, 32>}, {pipeline_mode = #tpu.pipeline_mode<synchronous>, transform_indices = @transform_2, window_bounds = array<i64: 1, 32>}, {pipeline_mode = #tpu.pipeline_mode<synchronous>, transform_indices = @transform_3, window_bounds = array<i64: 1, 32>}]} {
    %c0_i32 = arith.constant 0 : i32
    %0 = arith.cmpi eq, %arg0, %c0_i32 : i32
    %1 = arith.extui %0 : i1 to i32
    %c0_i32_0 = arith.constant 0 : i32
    %2 = arith.cmpi ne, %1, %c0_i32_0 : i32
    scf.if %2 {
      %cst_22 = arith.constant 0.000000e+00 : f32
      %35 = vector.broadcast %cst_22 : f32 to vector<1x32xf32>
      %c0_23 = arith.constant 0 : index
      %c0_24 = arith.constant 0 : index
      %36 = vector.load %arg5[%c0_23, %c0_24] : memref<1x32xf32, #tpu.memory_space<vmem>>, vector<1x32xf32>
      tpu.vector_store %arg5[%c0_23, %c0_24], %35 {strides = array<i32>} : memref<1x32xf32, #tpu.memory_space<vmem>>, vector<1x32xf32>,
    } else {
    }
    %c0 = arith.constant 0 : index
    %c0_1 = arith.constant 0 : index
    %c0_2 = arith.constant 0 : index
    %c0_3 = arith.constant 0 : index
    %3 = vector.load %arg1[%c0, %c0_1, %c0_2, %c0_3] : memref<1x18x16x12xbf16, #tpu.memory_space<vmem>>, vector<1x18x16x12xbf16>
    %4 = vector.shape_cast %3 : vector<1x18x16x12xbf16> to vector<18x16x12xbf16>
    %5 = vector.extract_strided_slice %4 {offsets = [0, 0, 0], sizes = [16, 16, 12], strides = [1, 1, 1]} : vector<18x16x12xbf16> to vector<16x16x12xbf16>
    %6 = vector.shape_cast %5 : vector<16x16x12xbf16> to vector<256x12xbf16>
    %c0_4 = arith.constant 0 : index
    %c0_5 = arith.constant 0 : index
    %c0_6 = arith.constant 0 : index
    %7 = vector.load %arg2[%c0_4, %c0_5, %c0_6] : memref<3x12x32xbf16, #tpu.memory_space<vmem>>, vector<1x12x32xbf16>
    %8 = vector.shape_cast %7 : vector<1x12x32xbf16> to vector<12x32xbf16>
    %cst = arith.constant dense<0.000000e+00> : vector<256x32xf32>
    %9 = tpu.matmul %6, %8, %cst {dimension_numbers = #tpu.dot_dimension_numbers<[1], [0], [0], [1], [0, 0, 1, 1], [], []>} : vector<256x12xbf16>, vector<12x32xbf16>, vector<256x32xf32> -> vector<256x32xf32>
    %10 = vector.extract_strided_slice %4 {offsets = [1, 0, 0], sizes = [16, 16, 12], strides = [1, 1, 1]} : vector<18x16x12xbf16> to vector<16x16x12xbf16>
    %11 = vector.shape_cast %10 : vector<16x16x12xbf16> to vector<256x12xbf16>
    %c1 = arith.constant 1 : index
    %c0_7 = arith.constant 0 : index
    %c0_8 = arith.constant 0 : index
    %12 = vector.load %arg2[%c1, %c0_7, %c0_8] : memref<3x12x32xbf16, #tpu.memory_space<vmem>>, vector<1x12x32xbf16>
    %13 = vector.shape_cast %12 : vector<1x12x32xbf16> to vector<12x32xbf16>
    %cst_9 = arith.constant dense<0.000000e+00> : vector<256x32xf32>
    %14 = tpu.matmul %11, %13, %cst_9 {dimension_numbers = #tpu.dot_dimension_numbers<[1], [0], [0], [1], [0, 0, 1, 1], [], []>} : vector<256x12xbf16>, vector<12x32xbf16>, vector<256x32xf32> -> vector<256x32xf32>
    %15 = arith.addf %9, %14 : vector<256x32xf32>
    %16 = vector.extract_strided_slice %4 {offsets = [2, 0, 0], sizes = [16, 16, 12], strides = [1, 1, 1]} : vector<18x16x12xbf16> to vector<16x16x12xbf16>
    %17 = vector.shape_cast %16 : vector<16x16x12xbf16> to vector<256x12xbf16>
    %c2 = arith.constant 2 : index
    %c0_10 = arith.constant 0 : index
    %c0_11 = arith.constant 0 : index
    %18 = vector.load %arg2[%c2, %c0_10, %c0_11] : memref<3x12x32xbf16, #tpu.memory_space<vmem>>, vector<1x12x32xbf16>
    %19 = vector.shape_cast %18 : vector<1x12x32xbf16> to vector<12x32xbf16>
    %cst_12 = arith.constant dense<0.000000e+00> : vector<256x32xf32>
    %20 = tpu.matmul %17, %19, %cst_12 {dimension_numbers = #tpu.dot_dimension_numbers<[1], [0], [0], [1], [0, 0, 1, 1], [], []>} : vector<256x12xbf16>, vector<12x32xbf16>, vector<256x32xf32> -> vector<256x32xf32>
    %21 = arith.addf %15, %20 : vector<256x32xf32>
    %c0_13 = arith.constant 0 : index
    %c0_14 = arith.constant 0 : index
    %22 = vector.load %arg3[%c0_13, %c0_14] : memref<1x32xf32, #tpu.memory_space<vmem>>, vector<1x32xf32>
    %23 = vector.broadcast %22 : vector<1x32xf32> to vector<256x32xf32>
    %24 = arith.addf %21, %23 : vector<256x32xf32>
    %cst_15 = arith.constant 0.000000e+00 : f32
    %25 = vector.broadcast %cst_15 : f32 to vector<256x32xf32>
    %26 = arith.maximumf %24, %25 : vector<256x32xf32>
    %c0_16 = arith.constant 0 : index
    %c0_17 = arith.constant 0 : index
    %27 = vector.load %arg5[%c0_16, %c0_17] : memref<1x32xf32, #tpu.memory_space<vmem>>, vector<1x32xf32>
    %cst_18 = arith.constant dense<0.000000e+00> : vector<32xf32>
    %28 = vector.multi_reduction <add>, %26, %cst_18 [0] : vector<256x32xf32> to vector<32xf32>
    %29 = vector.shape_cast %28 : vector<32xf32> to vector<1x32xf32>
    %30 = arith.addf %27, %29 : vector<1x32xf32>
    %c0_19 = arith.constant 0 : index
    %c0_20 = arith.constant 0 : index
    %31 = vector.load %arg5[%c0_19, %c0_20] : memref<1x32xf32, #tpu.memory_space<vmem>>, vector<1x32xf32>
    tpu.vector_store %arg5[%c0_19, %c0_20], %30 {strides = array<i32>} : memref<1x32xf32, #tpu.memory_space<vmem>>, vector<1x32xf32>,
    %c1_i32 = arith.constant 1 : i32
    %32 = arith.cmpi eq, %arg0, %c1_i32 : i32
    %33 = arith.extui %32 : i1 to i32
    %c0_i32_21 = arith.constant 0 : i32
    %34 = arith.cmpi ne, %33, %c0_i32_21 : i32
    scf.if %34 {
      %c0_22 = arith.constant 0 : index
      %c0_23 = arith.constant 0 : index
      %35 = vector.load %arg5[%c0_22, %c0_23] : memref<1x32xf32, #tpu.memory_space<vmem>>, vector<1x32xf32>
      %cst_24 = arith.constant 0.001953125 : f32
      %36 = vector.broadcast %cst_24 : f32 to vector<1x32xf32>
      %37 = arith.mulf %35, %36 : vector<1x32xf32>
      %38 = arith.mulf %37, %37 : vector<1x32xf32>
      %cst_25 = arith.constant dense<0.000000e+00> : vector<1xf32>
      %39 = vector.multi_reduction <add>, %38, %cst_25 [1] : vector<1x32xf32> to vector<1xf32>
      %40 = vector.shape_cast %39 : vector<1xf32> to vector<1x1xf32>
      %cst_26 = arith.constant 1.000000e-24 : f32
      %41 = vector.broadcast %cst_26 : f32 to vector<1x1xf32>
      %42 = arith.maximumf %40, %41 : vector<1x1xf32>
      %43 = math.rsqrt %42 : vector<1x1xf32>
      %44 = vector.broadcast %43 : vector<1x1xf32> to vector<1x32xf32>
      %45 = arith.mulf %37, %44 : vector<1x32xf32>
      %c0_27 = arith.constant 0 : index
      %c0_28 = arith.constant 0 : index
      %46 = vector.load %arg4[%c0_27, %c0_28] : memref<1x32xf32, #tpu.memory_space<vmem>>, vector<1x32xf32>
      tpu.vector_store %arg4[%c0_27, %c0_28], %45 {strides = array<i32>} : memref<1x32xf32, #tpu.memory_space<vmem>>, vector<1x32xf32>,
    } else {
    }
    return
  }
  func.func @transform_0(%arg0: i32) -> (i32, i32, i32, i32) {
    %c0_i32 = arith.constant 0 : i32
    %c0_i32_0 = arith.constant 0 : i32
    %c0_i32_1 = arith.constant 0 : i32
    %c0_i32_2 = arith.constant 0 : i32
    return %arg0, %c0_i32, %c0_i32_0, %c0_i32_1 : i32, i32, i32, i32
  }
  func.func @transform_1(%arg0: i32) -> (i32, i32, i32) {
    %c0_i32 = arith.constant 0 : i32
    %c0_i32_0 = arith.constant 0 : i32
    %c0_i32_1 = arith.constant 0 : i32
    %c0_i32_2 = arith.constant 0 : i32
    return %c0_i32, %c0_i32_0, %c0_i32_1 : i32, i32, i32
  }
  func.func @transform_2(%arg0: i32) -> (i32, i32) {
    %c0_i32 = arith.constant 0 : i32
    %c0_i32_0 = arith.constant 0 : i32
    %c0_i32_1 = arith.constant 0 : i32
    return %c0_i32, %c0_i32_0 : i32, i32
  }
  func.func @transform_3(%arg0: i32) -> (i32, i32) {
    %c0_i32 = arith.constant 0 : i32
    %c0_i32_0 = arith.constant 0 : i32
    %c0_i32_1 = arith.constant 0 : i32
    return %c0_i32, %c0_i32_0 : i32, i32
  }
}

</mosaic_0001>

<llo_original>
// kernel: tpu_custom_call.1
$region0: #{tpu_custom_call.1}
  #allocation0 [shape = 'u32[]', space=smem, size = 0x4, offset = 0x4, fixed_abs, tag = 'smem constant byte address 0x4 - core index']
  #allocation1 [shape = 'u32[144,128]{1,0:T(1,128)}', space=vmem, size = 0x12000, scoped, tag = 'internal scratch']
  #allocation2 [shape = 'f32[1,32]{1,0:T(1,128)}', space=vmem, size = 0x200, scoped, tag = 'scratch operand']
  %s0 = inlined_call_operand.vmem [shape: bf16[2,18,16,12], index: 0, kind: input, shape index: {}]
  %s1 = inlined_call_operand.vmem [shape: bf16[3,12,32], index: 1, kind: input, shape index: {}]
  %s2 = inlined_call_operand.vmem [shape: f32[1,32], index: 2, kind: input, shape index: {}]
  %s3 = inlined_call_operand.hbm [shape: f32[1,32], index: 3, kind: output, shape index: {}]
  %s4 = sld [smem:[#allocation0]]
  $region53: #{tpu_custom_call.1} parent=0
    _
  %s6 = ssub.s32 1, %s4
  %s7 = scalar_select 0, %s6, %s4
  $region1: #{tpu_custom_call.1} parent=0
    #allocation3 [shape = 'u8[512]{0}', space=vmem, size = 0x400, scoped, tag = 'output window, operand 0, single buffered']
    #allocation4 [shape = 's32[2]{0}', space=sflag, size = 0x8, scoped, tag = 'scoped memory for tpu_custom_call.1']
    %8 = vsyncpa [#allocation4], 0
    loop: start=0, step=1, limit=4
    $region2: #{tpu_custom_call.1} parent=1 // loop_pre_header
      _
    $region3: #{tpu_custom_call.1} parent=1 // loop_header
      %s10 = sphi 0, %s14
      %p11 = scmp.ge.s32.totalorder %s10, 4
      %s20 = sphi 0, %s22
      %s23 = sphi 0, %s20
      %s24 = sphi 0, %s23
      %s40 = sphi 0, %s24
      %s44 = sphi 0, %s44
      %s46 = sphi 0, %s44
      %s47 = sphi 0, %s46
      %s61 = sphi 0, %s47
      %s65 = sphi 0, %s65
      %s67 = sphi 0, %s65
      %s68 = sphi 0, %s67
      %s82 = sphi 0, %s68
      %s86 = sphi 0, %s86
      %s88 = sphi 0, %s86
      %s89 = sphi 0, %s88
      %s103 = sphi 0, %s89
    $region4: #{tpu_custom_call.1} parent=1 // loop_header_branch
      %13 = sbr.rel (%p11) target = $region8
    $region5: #{tpu_custom_call.1} parent=1 // loop_body
      %s15 = ssub.s32 %s10, 1
      %s16 = ssub.s32 %s10, 2
      %s17 = sadd.s32 %s10, 1
      %s18 = ssub.s32 %s10, %s17
      %p19 = scmp.eq.s32.totalorder %s18, 0
      %s21 = sadd.s32 %s20, 1
      %s22 = scalar_select %p19, %s20, %s21
      %p25 = pneg %p19
      %p26 = scmp.eq.s32.totalorder %s10, 1
      %p27 = por %p25, %p26
      %p28 = scmp.ne.s32.totalorder %s20, %s23
      %p29 = scmp.eq.s32.totalorder %s10, 0
      %p30 = por %p28, %p29
      %p31 = scmp.ne.s32.totalorder %s20, %s23
      %p32 = scmp.eq.s32.totalorder %s15, 1
      %p33 = por %p31, %p32
      %p34 = scmp.ne.s32.totalorder %s23, %s24
      %p35 = scmp.eq.s32.totalorder %s15, 0
      %p36 = por %p34, %p35
      %p37 = scmp.ne.s32.totalorder %s23, %s24
      %p38 = scmp.eq.s32.totalorder %s16, 1
      %p39 = por %p37, %p38
      %p41 = scmp.ne.s32.totalorder %s24, %s40
      %p42 = scmp.eq.s32.totalorder %s16, 0
      %p43 = por %p41, %p42
      %s45 = sadd.s32 %s44, 1
      %p48 = scmp.eq.s32.totalorder %s10, 1
      %p49 = scmp.ne.s32.totalorder %s44, %s46
      %p50 = scmp.eq.s32.totalorder %s10, 0
      %p51 = por %p49, %p50
      %p52 = scmp.ne.s32.totalorder %s44, %s46
      %p53 = scmp.eq.s32.totalorder %s15, 1
      %p54 = por %p52, %p53
      %p55 = scmp.ne.s32.totalorder %s46, %s47
      %p56 = scmp.eq.s32.totalorder %s15, 0
      %p57 = por %p55, %p56
      %p58 = scmp.ne.s32.totalorder %s46, %s47
      %p59 = scmp.eq.s32.totalorder %s16, 1
      %p60 = por %p58, %p59
      %p62 = scmp.ne.s32.totalorder %s47, %s61
      %p63 = scmp.eq.s32.totalorder %s16, 0
      %p64 = por %p62, %p63
      %s66 = sadd.s32 %s65, 1
      %p69 = scmp.eq.s32.totalorder %s10, 1
      %p70 = scmp.ne.s32.totalorder %s65, %s67
      %p71 = scmp.eq.s32.totalorder %s10, 0
      %p72 = por %p70, %p71
      %p73 = scmp.ne.s32.totalorder %s65, %s67
      %p74 = scmp.eq.s32.totalorder %s15, 1
      %p75 = por %p73, %p74
      %p76 = scmp.ne.s32.totalorder %s67, %s68
      %p77 = scmp.eq.s32.totalorder %s15, 0
      %p78 = por %p76, %p77
      %p79 = scmp.ne.s32.totalorder %s67, %s68
      %p80 = scmp.eq.s32.totalorder %s16, 1
      %p81 = por %p79, %p80
      %p83 = scmp.ne.s32.totalorder %s68, %s82
      %p84 = scmp.eq.s32.totalorder %s16, 0
      %p85 = por %p83, %p84
      %s87 = sadd.s32 %s86, 1
      %p90 = scmp.eq.s32.totalorder %s10, 1
      %p91 = scmp.ne.s32.totalorder %s86, %s88
      %p92 = scmp.eq.s32.totalorder %s10, 0
      %p93 = por %p91, %p92
      %p94 = scmp.ne.s32.totalorder %s86, %s88
      %p95 = scmp.eq.s32.totalorder %s15, 1
      %p96 = por %p94, %p95
      %p97 = scmp.ne.s32.totalorder %s88, %s89
      %p98 = scmp.eq.s32.totalorder %s15, 0
      %p99 = por %p97, %p98
      %p100 = scmp.ne.s32.totalorder %s88, %s89
      %p101 = scmp.eq.s32.totalorder %s16, 1
      %p102 = por %p100, %p101
      %p104 = scmp.ne.s32.totalorder %s89, %s103
      %p105 = scmp.eq.s32.totalorder %s16, 0
      %p106 = por %p104, %p105
      %p107 = scmp.le.s32.totalorder 1, %s10
      %p108 = scmp.lt.s32.totalorder %s10, 3
      %p109 = pnand %p107, %p108
      %p110 = pneg %p109
      // Predicated region
      $region9: #{tpu_custom_call.1} parent=5 // pred_check
        _
      $region10: #{tpu_custom_call.1} parent=5 // pred_check_branch
        %112 = sbr.rel (%p109) target = $region12
      $region11: #{tpu_custom_call.1} parent=5 // pred_region
        %s113 = ssub.s32 %s10, 1
        // Predicated region
        $region13: #{tpu_custom_call.1} parent=11 // pred_check
          %p114 = pneg %p57
        $region14: #{tpu_custom_call.1} parent=11 // pred_check_branch
          %116 = sbr.rel (%p114) target = $region16
        $region15: #{tpu_custom_call.1} parent=11 // pred_region
          _
        $region16: #{tpu_custom_call.1} parent=11 // pred_fallthru
          _
        // Predicated region
        $region17: #{tpu_custom_call.1} parent=11 // pred_check
          %p117 = pneg %p78
        $region18: #{tpu_custom_call.1} parent=11 // pred_check_branch
          %119 = sbr.rel (%p117) target = $region20
        $region19: #{tpu_custom_call.1} parent=11 // pred_region
          _
        $region20: #{tpu_custom_call.1} parent=11 // pred_fallthru
          _
      $region12: #{tpu_custom_call.1} parent=5 // pred_fallthru
        _
      %p120 = scmp.lt.s32.totalorder %s10, 2
      // Predicated region
      $region21: #{tpu_custom_call.1} parent=5 // pred_check
        %p121 = pneg %p120
      $region22: #{tpu_custom_call.1} parent=5 // pred_check_branch
        %123 = sbr.rel (%p121) target = $region24
      $region23: #{tpu_custom_call.1} parent=5 // pred_region
        // Predicated region
        $region25: #{tpu_custom_call.1} parent=23 // pred_check
          %p124 = pneg %p30
        $region26: #{tpu_custom_call.1} parent=23 // pred_check_branch
          %126 = sbr.rel (%p124) target = $region28
        $region27: #{tpu_custom_call.1} parent=23 // pred_region
          %p127 = scmp.lt.s32.totalorder %s10, 1
          %s128 = scalar_select %p127, %s10, 1
          %s129 = smul.addr %s128, 36
          %s130 = smul.addr %s129, 4
          %s131 = scalar_lea.vmem %s0, %s130
        $region28: #{tpu_custom_call.1} parent=23 // pred_fallthru
          _
      $region24: #{tpu_custom_call.1} parent=5 // pred_fallthru
        _
      %p132 = scmp.le.s32.totalorder 1, %s10
      %p133 = scmp.lt.s32.totalorder %s10, 3
      %p134 = pnand %p132, %p133
      %p135 = pneg %p134
      // Predicated region
      $region29: #{tpu_custom_call.1} parent=5 // pred_check
        _
      $region30: #{tpu_custom_call.1} parent=5 // pred_check_branch
        %137 = sbr.rel (%p134) target = $region32
      $region31: #{tpu_custom_call.1} parent=5 // pred_region
        %s138 = ssub.s32 %s10, 1
        %p139 = scmp.lt.s32.totalorder %s15, 1
        %s140 = scalar_select %p139, %s15, 1
        %s141 = smul.addr %s140, 36
        %s142 = smul.addr %s141, 4
        %s143 = scalar_lea.vmem %s0, %s142
        %p144 = pneg %p36
        %p145 = pneg %p33
        %p146 = pneg %p57
        %p147 = pneg %p54
        %p148 = pneg %p78
        %p149 = pneg %p75
        %p150 = pneg %p99
        %p151 = pneg %p96
        %p152 = scmp.lt.s32.totalorder %s15, 1
        %s153 = scalar_select %p152, %s15, 1
        %s154 = smul.addr %s153, 36
        %s155 = smul.addr %s154, 4
        %s156 = scalar_lea.vmem %s0, %s155
        %p158 = scmp.eq.s32.totalorder %s15, 0
        // Predicated region
        $region33: #{tpu_custom_call.1} parent=31 // pred_check
          %p159 = pneg %p158
        $region34: #{tpu_custom_call.1} parent=31 // pred_check_branch
          %161 = sbr.rel (%p159) target = $region36
        $region35: #{tpu_custom_call.1} parent=31 // pred_region
          %vm162 = vcmask 253952
          %163 = vst.msk [vmem:[#allocation2] sm:$0x1] %vm162, 0.0
        $region36: #{tpu_custom_call.1} parent=31 // pred_fallthru
          _
        %v164 = vld [vmem:[%s156] sm:$0xf]
        %v165 = vld [vmem:[%s156 + $0x4] sm:$0xf]
        %v166 = vld [vmem:[%s156 + $0x8] sm:$0xf]
        %v167 = vld [vmem:[%s156 + $0xc] sm:$0xf]
        %v168 = vld [vmem:[%s156 + $0x10] sm:$0xf]
        %v169 = vld [vmem:[%s156 + $0x14] sm:$0xf]
        %v170 = vld [vmem:[%s156 + $0x18] sm:$0xf]
        %v171 = vld [vmem:[%s156 + $0x1c] sm:$0xf]
        %v172 = vld [vmem:[%s156 + $0x20] sm:$0xf]
        %v173 = vld [vmem:[%s156 + $0x24] sm:$0xf]
        %v174 = vld [vmem:[%s156 + $0x28] sm:$0xf]
        %v175 = vld [vmem:[%s156 + $0x2c] sm:$0xf]
        %v176 = vld [vmem:[%s156 + $0x30] sm:$0xf]
        %v177 = vld [vmem:[%s156 + $0x34] sm:$0xf]
        %v178 = vld [vmem:[%s156 + $0x38] sm:$0xf]
        %v179 = vld [vmem:[%s156 + $0x3c] sm:$0xf]
        %v180 = vld [vmem:[%s156 + $0x40] sm:$0xf]
        %v181 = vld [vmem:[%s156 + $0x44] sm:$0xf]
        %v182 = vld [vmem:[%s156 + $0x48] sm:$0xf]
        %v183 = vld [vmem:[%s156 + $0x4c] sm:$0xf]
        %v184 = vld [vmem:[%s156 + $0x50] sm:$0xf]
        %v185 = vld [vmem:[%s156 + $0x54] sm:$0xf]
        %v186 = vld [vmem:[%s156 + $0x58] sm:$0xf]
        %v187 = vld [vmem:[%s156 + $0x5c] sm:$0xf]
        %v188 = vld [vmem:[%s156 + $0x60] sm:$0xf]
        %v189 = vld [vmem:[%s156 + $0x64] sm:$0xf]
        %v190 = vld [vmem:[%s156 + $0x68] sm:$0xf]
        %v191 = vld [vmem:[%s156 + $0x6c] sm:$0xf]
        %v192 = vld [vmem:[%s156 + $0x70] sm:$0xf]
        %v193 = vld [vmem:[%s156 + $0x74] sm:$0xf]
        %v194 = vld [vmem:[%s156 + $0x78] sm:$0xf]
        %v195 = vld [vmem:[%s156 + $0x7c] sm:$0xf]
        %v196 = vld [vmem:[%s156 + $0x80] sm:$0xf]
        %v197 = vld [vmem:[%s156 + $0x84] sm:$0xf]
        %v198 = vld [vmem:[%s156 + $0x88] sm:$0xf]
        %v199 = vld [vmem:[%s156 + $0x8c] sm:$0xf]
        %v200 = vld [vmem:[%s1] sm:$0xf]
        %v201 = vld [vmem:[%s1 + $0x4] sm:$0x3]
        %s202 = scalar_lea.vmem %s1, 8
        %v203 = vld [vmem:[%s202] sm:$0xf]
        %v204 = vld [vmem:[%s202 + $0x4] sm:$0x3]
        %v237 = vunpack.c.l.b16 %v166
        %v238 = vunpack.c.l.b16 %v167
        %v239 = vunpack.c.l.b16 %v168
        %v240 = vunpack.c.l.b16 %v169
        %v241 = vunpack.c.l.b16 %v170
        %v242 = vunpack.c.l.b16 %v171
        %v243 = vunpack.c.l.b16 %v172
        %v244 = vunpack.c.l.b16 %v173
        %v245 = vunpack.c.l.b16 %v174
        %v246 = vunpack.c.l.b16 %v175
        %v247 = vunpack.c.l.b16 %v176
        %v248 = vunpack.c.l.b16 %v177
        %v249 = vunpack.c.l.b16 %v178
        %v250 = vunpack.c.l.b16 %v179
        %v251 = vunpack.c.l.b16 %v180
        %v252 = vunpack.c.l.b16 %v181
        %v253 = vunpack.c.l.b16 %v182
        %v254 = vunpack.c.l.b16 %v183
        %v255 = vunpack.c.l.b16 %v184
        %v256 = vunpack.c.l.b16 %v185
        %v257 = vunpack.c.l.b16 %v186
        %v258 = vunpack.c.l.b16 %v187
        %v259 = vunpack.c.l.b16 %v188
        %v260 = vunpack.c.l.b16 %v189
        %v261 = vunpack.c.l.b16 %v190
        %v262 = vunpack.c.l.b16 %v191
        %v263 = vunpack.c.l.b16 %v192
        %v264 = vunpack.c.l.b16 %v193
        %v265 = vunpack.c.l.b16 %v194
        %v266 = vunpack.c.l.b16 %v195
        %v267 = vunpack.c.l.b16 %v196
        %v268 = vunpack.c.l.b16 %v197
        %v269 = vpack.c.b16 %v238, %v237
        %v270 = vpack.c.b16 %v240, %v239
        %v271 = vpack.c.b16 %v242, %v241
        %v272 = vpack.c.b16 %v244, %v243
        %v273 = vpack.c.b16 %v246, %v245
        %v274 = vpack.c.b16 %v248, %v247
        %v275 = vpack.c.b16 %v250, %v249
        %v276 = vpack.c.b16 %v252, %v251
        %v277 = vpack.c.b16 %v254, %v253
        %v278 = vpack.c.b16 %v256, %v255
        %v279 = vpack.c.b16 %v258, %v257
        %v280 = vpack.c.b16 %v260, %v259
        %v281 = vpack.c.b16 %v262, %v261
        %v282 = vpack.c.b16 %v264, %v263
        %v283 = vpack.c.b16 %v266, %v265
        %v284 = vpack.c.b16 %v268, %v267
        %v287 = vunpack.c.l.b16 %v203
        %v288 = vunpack.c.l.b16 %v204
        %v289 = vpack.c.b16 %v288, %v287
        %vm290 = vcmask 97280
        %v292 = vsel %vm290, %v269, 0
        %v295 = vsel %vm290, %v270, 0
        %v298 = vsel %vm290, %v271, 0
        %v301 = vsel %vm290, %v272, 0
        %v304 = vsel %vm290, %v273, 0
        %v307 = vsel %vm290, %v274, 0
        %v310 = vsel %vm290, %v275, 0
        %v313 = vsel %vm290, %v276, 0
        %v316 = vsel %vm290, %v277, 0
        %v319 = vsel %vm290, %v278, 0
        %v322 = vsel %vm290, %v279, 0
        %v325 = vsel %vm290, %v280, 0
        %v328 = vsel %vm290, %v281, 0
        %v331 = vsel %vm290, %v282, 0
        %v334 = vsel %vm290, %v283, 0
        %v337 = vsel %vm290, %v284, 0
        %vm339 = vcmask 1045504
        %v341 = vsel %vm339, %v289, 0
        %343 = vmatprep.subr.bf16.mxu0 0
        %344 = vmatpush1.bf16.msra.mxu0 %v341
        %345 = vmatprep.subr.bf16.mxu0 0
        %346 = vmatpush1.bf16.msra.mxu0 0
        %347 = vmatprep.subr.bf16.mxu0 0
        %348 = vmatpush1.bf16.msra.mxu0 0
        %349 = vmatprep.subr.bf16.mxu0 0
        %350 = vmatpush1.bf16.msra.mxu0 0
        %351 = vmatprep.subr.bf16.mxu0 0
        %352 = vmatpush1.bf16.msra.mxu0 0
        %353 = vmatprep.subr.bf16.mxu0 0
        %354 = vmatpush1.bf16.msra.mxu0 0
        %355 = vmatprep.subr.bf16.mxu0 0
        %356 = vmatpush1.bf16.msra.mxu0 0
        %357 = vmatprep.subr.bf16.mxu0 0
        %358 = vmatpush1.bf16.msra.mxu0 0
        %359 = vmatprep.subr.bf16.mxu0 0
        %360 = vmatpush1.bf16.msra.mxu0 0
        %361 = vmatprep.subr.bf16.mxu0 0
        %362 = vmatpush1.bf16.msra.mxu0 0
        %363 = vmatprep.subr.bf16.mxu0 0
        %364 = vmatpush1.bf16.msra.mxu0 0
        %365 = vmatprep.subr.bf16.mxu0 0
        %366 = vmatpush1.bf16.msra.mxu0 0
        %367 = vmatprep.subr.bf16.mxu0 0
        %368 = vmatpush1.bf16.msra.mxu0 0
        %369 = vmatprep.subr.bf16.mxu0 0
        %370 = vmatpush1.bf16.msra.mxu0 0
        %371 = vmatprep.subr.bf16.mxu0 0
        %372 = vmatpush1.bf16.msra.mxu0 0
        %373 = vmatprep.subr.bf16.mxu0 0
        %374 = vmatpush1.bf16.msra.mxu0 0
        %375 = vmatprep.mubr.bf16.mxu0 0
        %376 = vmatmul.mubr.bf16.gmra.mrb[0].mxu0 %v292
        %v377 = vpop.f32.mrb[0].mxu0
        %v378 = vadd.f32 0.0, %v377
        %v379 = vpop.f32.mrb[0].mxu0
        %v380 = vpop.f32.mrb[0].mxu0
        %v381 = vadd.f32 0.0, %v380
        %v382 = vpop.f32.mrb[0].mxu0
        %383 = vmatprep.mubr.bf16.mxu0 0
        %384 = vmatmul.mubr.bf16.gmra.mrb[0].mxu0 %v295
        %v385 = vpop.f32.mrb[0].mxu0
        %v386 = vadd.f32 0.0, %v385
        %v387 = vpop.f32.mrb[0].mxu0
        %v388 = vpop.f32.mrb[0].mxu0
        %v389 = vadd.f32 0.0, %v388
        %v390 = vpop.f32.mrb[0].mxu0
        %391 = vmatprep.mubr.bf16.mxu0 0
        %392 = vmatmul.mubr.bf16.gmra.mrb[0].mxu0 %v298
        %v393 = vpop.f32.mrb[0].mxu0
        %v394 = vadd.f32 0.0, %v393
        %v395 = vpop.f32.mrb[0].mxu0
        %v396 = vpop.f32.mrb[0].mxu0
        %v397 = vadd.f32 0.0, %v396
        %v398 = vpop.f32.mrb[0].mxu0
        %399 = vmatprep.mubr.bf16.mxu0 0
        %400 = vmatmul.mubr.bf16.gmra.mrb[0].mxu0 %v301
        %v401 = vpop.f32.mrb[0].mxu0
        %v402 = vadd.f32 0.0, %v401
        %v403 = vpop.f32.mrb[0].mxu0
        %v404 = vpop.f32.mrb[0].mxu0
        %v405 = vadd.f32 0.0, %v404
        %v406 = vpop.f32.mrb[0].mxu0
        %407 = vmatprep.mubr.bf16.mxu0 0
        %408 = vmatmul.mubr.bf16.gmra.mrb[0].mxu0 %v304
        %v409 = vpop.f32.mrb[0].mxu0
        %v410 = vadd.f32 0.0, %v409
        %v411 = vpop.f32.mrb[0].mxu0
        %v412 = vpop.f32.mrb[0].mxu0
        %v413 = vadd.f32 0.0, %v412
        %v414 = vpop.f32.mrb[0].mxu0
        %415 = vmatprep.mubr.bf16.mxu0 0
        %416 = vmatmul.mubr.bf16.gmra.mrb[0].mxu0 %v307
        %v417 = vpop.f32.mrb[0].mxu0
        %v418 = vadd.f32 0.0, %v417
        %v419 = vpop.f32.mrb[0].mxu0
        %v420 = vpop.f32.mrb[0].mxu0
        %v421 = vadd.f32 0.0, %v420
        %v422 = vpop.f32.mrb[0].mxu0
        %423 = vmatprep.mubr.bf16.mxu0 0
        %424 = vmatmul.mubr.bf16.gmra.mrb[0].mxu0 %v310
        %v425 = vpop.f32.mrb[0].mxu0
        %v426 = vadd.f32 0.0, %v425
        %v427 = vpop.f32.mrb[0].mxu0
        %v428 = vpop.f32.mrb[0].mxu0
        %v429 = vadd.f32 0.0, %v428
        %v430 = vpop.f32.mrb[0].mxu0
        %431 = vmatprep.mubr.bf16.mxu0 0
        %432 = vmatmul.mubr.bf16.gmra.mrb[0].mxu0 %v313
        %v433 = vpop.f32.mrb[0].mxu0
        %v434 = vadd.f32 0.0, %v433
        %v435 = vpop.f32.mrb[0].mxu0
        %v436 = vpop.f32.mrb[0].mxu0
        %v437 = vadd.f32 0.0, %v436
        %v438 = vpop.f32.mrb[0].mxu0
        %439 = vmatprep.mubr.bf16.mxu0 0
        %440 = vmatmul.mubr.bf16.gmra.mrb[0].mxu0 %v316
        %v441 = vpop.f32.mrb[0].mxu0
        %v442 = vadd.f32 0.0, %v441
        %v443 = vpop.f32.mrb[0].mxu0
        %v444 = vpop.f32.mrb[0].mxu0
        %v445 = vadd.f32 0.0, %v444
        %v446 = vpop.f32.mrb[0].mxu0
        %447 = vmatprep.mubr.bf16.mxu0 0
        %448 = vmatmul.mubr.bf16.gmra.mrb[0].mxu0 %v319
        %v449 = vpop.f32.mrb[0].mxu0
        %v450 = vadd.f32 0.0, %v449
        %v451 = vpop.f32.mrb[0].mxu0
        %v452 = vpop.f32.mrb[0].mxu0
        %v453 = vadd.f32 0.0, %v452
        %v454 = vpop.f32.mrb[0].mxu0
        %455 = vmatprep.mubr.bf16.mxu0 0
        %456 = vmatmul.mubr.bf16.gmra.mrb[0].mxu0 %v322
        %v457 = vpop.f32.mrb[0].mxu0
        %v458 = vadd.f32 0.0, %v457
        %v459 = vpop.f32.mrb[0].mxu0
        %v460 = vpop.f32.mrb[0].mxu0
        %v461 = vadd.f32 0.0, %v460
        %v462 = vpop.f32.mrb[0].mxu0
        %463 = vmatprep.mubr.bf16.mxu0 0
        %464 = vmatmul.mubr.bf16.gmra.mrb[0].mxu0 %v325
        %v465 = vpop.f32.mrb[0].mxu0
        %v466 = vadd.f32 0.0, %v465
        %v467 = vpop.f32.mrb[0].mxu0
        %v468 = vpop.f32.mrb[0].mxu0
        %v469 = vadd.f32 0.0, %v468
        %v470 = vpop.f32.mrb[0].mxu0
        %471 = vmatprep.mubr.bf16.mxu0 0
        %472 = vmatmul.mubr.bf16.gmra.mrb[0].mxu0 %v328
        %v473 = vpop.f32.mrb[0].mxu0
        %v474 = vadd.f32 0.0, %v473
        %v475 = vpop.f32.mrb[0].mxu0
        %v476 = vpop.f32.mrb[0].mxu0
        %v477 = vadd.f32 0.0, %v476
        %v478 = vpop.f32.mrb[0].mxu0
        %479 = vmatprep.mubr.bf16.mxu0 0
        %480 = vmatmul.mubr.bf16.gmra.mrb[0].mxu0 %v331
        %v481 = vpop.f32.mrb[0].mxu0
        %v482 = vadd.f32 0.0, %v481
        %v483 = vpop.f32.mrb[0].mxu0
        %v484 = vpop.f32.mrb[0].mxu0
        %v485 = vadd.f32 0.0, %v484
        %v486 = vpop.f32.mrb[0].mxu0
        %487 = vmatprep.mubr.bf16.mxu0 0
        %488 = vmatmul.mubr.bf16.gmra.mrb[0].mxu0 %v334
        %v489 = vpop.f32.mrb[0].mxu0
        %v490 = vadd.f32 0.0, %v489
        %v491 = vpop.f32.mrb[0].mxu0
        %v492 = vpop.f32.mrb[0].mxu0
        %v493 = vadd.f32 0.0, %v492
        %v494 = vpop.f32.mrb[0].mxu0
        %495 = vmatprep.mubr.bf16.mxu0 0
        %496 = vmatmul.mubr.bf16.gmra.mrb[0].mxu0 %v337
        %v497 = vpop.f32.mrb[0].mxu0
        %v498 = vadd.f32 0.0, %v497
        %v499 = vpop.f32.mrb[0].mxu0
        %v500 = vpop.f32.mrb[0].mxu0
        %v501 = vadd.f32 0.0, %v500
        %v502 = vpop.f32.mrb[0].mxu0
        %503 = vdwg.mxu0
        %v506 = vunpack.c.l.b16 %v164
        %v507 = vunpack.c.l.b16 %v165
        %v508 = vpack.c.b16 %v507, %v506
        %v511 = vunpack.c.l.b16 %v200
        %v512 = vunpack.c.l.b16 %v201
        %v513 = vpack.c.b16 %v512, %v511
        %v515 = vsel %vm290, %v508, 0
        %v518 = vsel %vm339, %v513, 0
        %520 = vmatprep.subr.bf16.mxu0 0
        %521 = vmatpush1.bf16.msra.mxu0 %v518
        %522 = vmatprep.subr.bf16.mxu0 0
        %523 = vmatpush1.bf16.msra.mxu0 0
        %524 = vmatprep.subr.bf16.mxu0 0
        %525 = vmatpush1.bf16.msra.mxu0 0
        %526 = vmatprep.subr.bf16.mxu0 0
        %527 = vmatpush1.bf16.msra.mxu0 0
        %528 = vmatprep.subr.bf16.mxu0 0
        %529 = vmatpush1.bf16.msra.mxu0 0
        %530 = vmatprep.subr.bf16.mxu0 0
        %531 = vmatpush1.bf16.msra.mxu0 0
        %532 = vmatprep.subr.bf16.mxu0 0
        %533 = vmatpush1.bf16.msra.mxu0 0
        %534 = vmatprep.subr.bf16.mxu0 0
        %535 = vmatpush1.bf16.msra.mxu0 0
        %536 = vmatprep.subr.bf16.mxu0 0
        %537 = vmatpush1.bf16.msra.mxu0 0
        %538 = vmatprep.subr.bf16.mxu0 0
        %539 = vmatpush1.bf16.msra.mxu0 0
        %540 = vmatprep.subr.bf16.mxu0 0
        %541 = vmatpush1.bf16.msra.mxu0 0
        %542 = vmatprep.subr.bf16.mxu0 0
        %543 = vmatpush1.bf16.msra.mxu0 0
        %544 = vmatprep.subr.bf16.mxu0 0
        %545 = vmatpush1.bf16.msra.mxu0 0
        %546 = vmatprep.subr.bf16.mxu0 0
        %547 = vmatpush1.bf16.msra.mxu0 0
        %548 = vmatprep.subr.bf16.mxu0 0
        %549 = vmatpush1.bf16.msra.mxu0 0
        %550 = vmatprep.subr.bf16.mxu0 0
        %551 = vmatpush1.bf16.msra.mxu0 0
        %552 = vmatprep.mubr.bf16.mxu0 0
        %553 = vmatmul.mubr.bf16.gmra.mrb[0].mxu0 %v515
        %v554 = vpop.f32.mrb[0].mxu0
        %v555 = vadd.f32 %v378, %v554
        %v556 = vpop.f32.mrb[0].mxu0
        %v557 = vpop.f32.mrb[0].mxu0
        %v558 = vadd.f32 %v381, %v557
        %v559 = vpop.f32.mrb[0].mxu0
        %560 = vmatprep.mubr.bf16.mxu0 0
        %561 = vmatmul.mubr.bf16.gmra.mrb[0].mxu0 %v292
        %v562 = vpop.f32.mrb[0].mxu0
        %v563 = vadd.f32 %v386, %v562
        %v564 = vpop.f32.mrb[0].mxu0
        %v565 = vpop.f32.mrb[0].mxu0
        %v566 = vadd.f32 %v389, %v565
        %v567 = vpop.f32.mrb[0].mxu0
        %568 = vmatprep.mubr.bf16.mxu0 0
        %569 = vmatmul.mubr.bf16.gmra.mrb[0].mxu0 %v295
        %v570 = vpop.f32.mrb[0].mxu0
        %v571 = vadd.f32 %v394, %v570
        %v572 = vpop.f32.mrb[0].mxu0
        %v573 = vpop.f32.mrb[0].mxu0
        %v574 = vadd.f32 %v397, %v573
        %v575 = vpop.f32.mrb[0].mxu0
        %576 = vmatprep.mubr.bf16.mxu0 0
        %577 = vmatmul.mubr.bf16.gmra.mrb[0].mxu0 %v298
        %v578 = vpop.f32.mrb[0].mxu0
        %v579 = vadd.f32 %v402, %v578
        %v580 = vpop.f32.mrb[0].mxu0
        %v581 = vpop.f32.mrb[0].mxu0
        %v582 = vadd.f32 %v405, %v581
        %v583 = vpop.f32.mrb[0].mxu0
        %584 = vmatprep.mubr.bf16.mxu0 0
        %585 = vmatmul.mubr.bf16.gmra.mrb[0].mxu0 %v301
        %v586 = vpop.f32.mrb[0].mxu0
        %v587 = vadd.f32 %v410, %v586
        %v588 = vpop.f32.mrb[0].mxu0
        %v589 = vpop.f32.mrb[0].mxu0
        %v590 = vadd.f32 %v413, %v589
        %v591 = vpop.f32.mrb[0].mxu0
        %592 = vmatprep.mubr.bf16.mxu0 0
        %593 = vmatmul.mubr.bf16.gmra.mrb[0].mxu0 %v304
        %v594 = vpop.f32.mrb[0].mxu0
        %v595 = vadd.f32 %v418, %v594
        %v596 = vpop.f32.mrb[0].mxu0
        %v597 = vpop.f32.mrb[0].mxu0
        %v598 = vadd.f32 %v421, %v597
        %v599 = vpop.f32.mrb[0].mxu0
        %600 = vmatprep.mubr.bf16.mxu0 0
        %601 = vmatmul.mubr.bf16.gmra.mrb[0].mxu0 %v307
        %v602 = vpop.f32.mrb[0].mxu0
        %v603 = vadd.f32 %v426, %v602
        %v604 = vpop.f32.mrb[0].mxu0
        %v605 = vpop.f32.mrb[0].mxu0
        %v606 = vadd.f32 %v429, %v605
        %v607 = vpop.f32.mrb[0].mxu0
        %608 = vmatprep.mubr.bf16.mxu0 0
        %609 = vmatmul.mubr.bf16.gmra.mrb[0].mxu0 %v310
        %v610 = vpop.f32.mrb[0].mxu0
        %v611 = vadd.f32 %v434, %v610
        %v612 = vpop.f32.mrb[0].mxu0
        %v613 = vpop.f32.mrb[0].mxu0
        %v614 = vadd.f32 %v437, %v613
        %v615 = vpop.f32.mrb[0].mxu0
        %616 = vmatprep.mubr.bf16.mxu0 0
        %617 = vmatmul.mubr.bf16.gmra.mrb[0].mxu0 %v313
        %v618 = vpop.f32.mrb[0].mxu0
        %v619 = vadd.f32 %v442, %v618
        %v620 = vpop.f32.mrb[0].mxu0
        %v621 = vpop.f32.mrb[0].mxu0
        %v622 = vadd.f32 %v445, %v621
        %v623 = vpop.f32.mrb[0].mxu0
        %624 = vmatprep.mubr.bf16.mxu0 0
        %625 = vmatmul.mubr.bf16.gmra.mrb[0].mxu0 %v316
        %v626 = vpop.f32.mrb[0].mxu0
        %v627 = vadd.f32 %v450, %v626
        %v628 = vpop.f32.mrb[0].mxu0
        %v629 = vpop.f32.mrb[0].mxu0
        %v630 = vadd.f32 %v453, %v629
        %v631 = vpop.f32.mrb[0].mxu0
        %632 = vmatprep.mubr.bf16.mxu0 0
        %633 = vmatmul.mubr.bf16.gmra.mrb[0].mxu0 %v319
        %v634 = vpop.f32.mrb[0].mxu0
        %v635 = vadd.f32 %v458, %v634
        %v636 = vpop.f32.mrb[0].mxu0
        %v637 = vpop.f32.mrb[0].mxu0
        %v638 = vadd.f32 %v461, %v637
        %v639 = vpop.f32.mrb[0].mxu0
        %640 = vmatprep.mubr.bf16.mxu0 0
        %641 = vmatmul.mubr.bf16.gmra.mrb[0].mxu0 %v322
        %v642 = vpop.f32.mrb[0].mxu0
        %v643 = vadd.f32 %v466, %v642
        %v644 = vpop.f32.mrb[0].mxu0
        %v645 = vpop.f32.mrb[0].mxu0
        %v646 = vadd.f32 %v469, %v645
        %v647 = vpop.f32.mrb[0].mxu0
        %648 = vmatprep.mubr.bf16.mxu0 0
        %649 = vmatmul.mubr.bf16.gmra.mrb[0].mxu0 %v325
        %v650 = vpop.f32.mrb[0].mxu0
        %v651 = vadd.f32 %v474, %v650
        %v652 = vpop.f32.mrb[0].mxu0
        %v653 = vpop.f32.mrb[0].mxu0
        %v654 = vadd.f32 %v477, %v653
        %v655 = vpop.f32.mrb[0].mxu0
        %656 = vmatprep.mubr.bf16.mxu0 0
        %657 = vmatmul.mubr.bf16.gmra.mrb[0].mxu0 %v328
        %v658 = vpop.f32.mrb[0].mxu0
        %v659 = vadd.f32 %v482, %v658
        %v660 = vpop.f32.mrb[0].mxu0
        %v661 = vpop.f32.mrb[0].mxu0
        %v662 = vadd.f32 %v485, %v661
        %v663 = vpop.f32.mrb[0].mxu0
        %664 = vmatprep.mubr.bf16.mxu0 0
        %665 = vmatmul.mubr.bf16.gmra.mrb[0].mxu0 %v331
        %v666 = vpop.f32.mrb[0].mxu0
        %v667 = vadd.f32 %v490, %v666
        %v668 = vpop.f32.mrb[0].mxu0
        %v669 = vpop.f32.mrb[0].mxu0
        %v670 = vadd.f32 %v493, %v669
        %v671 = vpop.f32.mrb[0].mxu0
        %672 = vmatprep.mubr.bf16.mxu0 0
        %673 = vmatmul.mubr.bf16.gmra.mrb[0].mxu0 %v334
        %v674 = vpop.f32.mrb[0].mxu0
        %v675 = vadd.f32 %v498, %v674
        %v676 = vpop.f32.mrb[0].mxu0
        %v677 = vpop.f32.mrb[0].mxu0
        %v678 = vadd.f32 %v501, %v677
        %v679 = vpop.f32.mrb[0].mxu0
        %680 = vdwg.mxu0
        %s681 = scalar_lea.vmem %s1, 16
        %v682 = vld [vmem:[%s681] sm:$0xf]
        %v683 = vld [vmem:[%s681 + $0x4] sm:$0x3]
        %v686 = vunpack.c.l.b16 %v198
        %v687 = vunpack.c.l.b16 %v199
        %v688 = vpack.c.b16 %v687, %v686
        %v691 = vunpack.c.l.b16 %v682
        %v692 = vunpack.c.l.b16 %v683
        %v693 = vpack.c.b16 %v692, %v691
        %v695 = vsel %vm290, %v688, 0
        %v698 = vsel %vm339, %v693, 0
        %700 = vmatprep.subr.bf16.mxu0 0
        %701 = vmatpush1.bf16.msra.mxu0 %v698
        %702 = vmatprep.subr.bf16.mxu0 0
        %703 = vmatpush1.bf16.msra.mxu0 0
        %704 = vmatprep.subr.bf16.mxu0 0
        %705 = vmatpush1.bf16.msra.mxu0 0
        %706 = vmatprep.subr.bf16.mxu0 0
        %707 = vmatpush1.bf16.msra.mxu0 0
        %708 = vmatprep.subr.bf16.mxu0 0
        %709 = vmatpush1.bf16.msra.mxu0 0
        %710 = vmatprep.subr.bf16.mxu0 0
        %711 = vmatpush1.bf16.msra.mxu0 0
        %712 = vmatprep.subr.bf16.mxu0 0
        %713 = vmatpush1.bf16.msra.mxu0 0
        %714 = vmatprep.subr.bf16.mxu0 0
        %715 = vmatpush1.bf16.msra.mxu0 0
        %716 = vmatprep.subr.bf16.mxu0 0
        %717 = vmatpush1.bf16.msra.mxu0 0
        %718 = vmatprep.subr.bf16.mxu0 0
        %719 = vmatpush1.bf16.msra.mxu0 0
        %720 = vmatprep.subr.bf16.mxu0 0
        %721 = vmatpush1.bf16.msra.mxu0 0
        %722 = vmatprep.subr.bf16.mxu0 0
        %723 = vmatpush1.bf16.msra.mxu0 0
        %724 = vmatprep.subr.bf16.mxu0 0
        %725 = vmatpush1.bf16.msra.mxu0 0
        %726 = vmatprep.subr.bf16.mxu0 0
        %727 = vmatpush1.bf16.msra.mxu0 0
        %728 = vmatprep.subr.bf16.mxu0 0
        %729 = vmatpush1.bf16.msra.mxu0 0
        %730 = vmatprep.subr.bf16.mxu0 0
        %731 = vmatpush1.bf16.msra.mxu0 0
        %732 = vmatprep.mubr.bf16.mxu0 0
        %733 = vmatmul.mubr.bf16.gmra.mrb[0].mxu0 %v295
        %v734 = vpop.f32.mrb[0].mxu0
        %v735 = vadd.f32 0.0, %v734
        %v736 = vpop.f32.mrb[0].mxu0
        %v737 = vpop.f32.mrb[0].mxu0
        %v738 = vadd.f32 0.0, %v737
        %v739 = vpop.f32.mrb[0].mxu0
        %740 = vmatprep.mubr.bf16.mxu0 0
        %741 = vmatmul.mubr.bf16.gmra.mrb[0].mxu0 %v298
        %v742 = vpop.f32.mrb[0].mxu0
        %v743 = vadd.f32 0.0, %v742
        %v744 = vpop.f32.mrb[0].mxu0
        %v745 = vpop.f32.mrb[0].mxu0
        %v746 = vadd.f32 0.0, %v745
        %v747 = vpop.f32.mrb[0].mxu0
        %748 = vmatprep.mubr.bf16.mxu0 0
        %749 = vmatmul.mubr.bf16.gmra.mrb[0].mxu0 %v301
        %v750 = vpop.f32.mrb[0].mxu0
        %v751 = vadd.f32 0.0, %v750
        %v752 = vpop.f32.mrb[0].mxu0
        %v753 = vpop.f32.mrb[0].mxu0
        %v754 = vadd.f32 0.0, %v753
        %v755 = vpop.f32.mrb[0].mxu0
        %756 = vmatprep.mubr.bf16.mxu0 0
        %757 = vmatmul.mubr.bf16.gmra.mrb[0].mxu0 %v304
        %v758 = vpop.f32.mrb[0].mxu0
        %v759 = vadd.f32 0.0, %v758
        %v760 = vpop.f32.mrb[0].mxu0
        %v761 = vpop.f32.mrb[0].mxu0
        %v762 = vadd.f32 0.0, %v761
        %v763 = vpop.f32.mrb[0].mxu0
        %764 = vmatprep.mubr.bf16.mxu0 0
        %765 = vmatmul.mubr.bf16.gmra.mrb[0].mxu0 %v307
        %v766 = vpop.f32.mrb[0].mxu0
        %v767 = vadd.f32 0.0, %v766
        %v768 = vpop.f32.mrb[0].mxu0
        %v769 = vpop.f32.mrb[0].mxu0
        %v770 = vadd.f32 0.0, %v769
        %v771 = vpop.f32.mrb[0].mxu0
        %772 = vmatprep.mubr.bf16.mxu0 0
        %773 = vmatmul.mubr.bf16.gmra.mrb[0].mxu0 %v310
        %v774 = vpop.f32.mrb[0].mxu0
        %v775 = vadd.f32 0.0, %v774
        %v776 = vpop.f32.mrb[0].mxu0
        %v777 = vpop.f32.mrb[0].mxu0
        %v778 = vadd.f32 0.0, %v777
        %v779 = vpop.f32.mrb[0].mxu0
        %780 = vmatprep.mubr.bf16.mxu0 0
        %781 = vmatmul.mubr.bf16.gmra.mrb[0].mxu0 %v313
        %v782 = vpop.f32.mrb[0].mxu0
        %v783 = vadd.f32 0.0, %v782
        %v784 = vpop.f32.mrb[0].mxu0
        %v785 = vpop.f32.mrb[0].mxu0
        %v786 = vadd.f32 0.0, %v785
        %v787 = vpop.f32.mrb[0].mxu0
        %788 = vmatprep.mubr.bf16.mxu0 0
        %789 = vmatmul.mubr.bf16.gmra.mrb[0].mxu0 %v316
        %v790 = vpop.f32.mrb[0].mxu0
        %v791 = vadd.f32 0.0, %v790
        %v792 = vpop.f32.mrb[0].mxu0
        %v793 = vpop.f32.mrb[0].mxu0
        %v794 = vadd.f32 0.0, %v793
        %v795 = vpop.f32.mrb[0].mxu0
        %796 = vmatprep.mubr.bf16.mxu0 0
        %797 = vmatmul.mubr.bf16.gmra.mrb[0].mxu0 %v319
        %v798 = vpop.f32.mrb[0].mxu0
        %v799 = vadd.f32 0.0, %v798
        %v800 = vpop.f32.mrb[0].mxu0
        %v801 = vpop.f32.mrb[0].mxu0
        %v802 = vadd.f32 0.0, %v801
        %v803 = vpop.f32.mrb[0].mxu0
        %804 = vmatprep.mubr.bf16.mxu0 0
        %805 = vmatmul.mubr.bf16.gmra.mrb[0].mxu0 %v322
        %v806 = vpop.f32.mrb[0].mxu0
        %v807 = vadd.f32 0.0, %v806
        %v808 = vpop.f32.mrb[0].mxu0
        %v809 = vpop.f32.mrb[0].mxu0
        %v810 = vadd.f32 0.0, %v809
        %v811 = vpop.f32.mrb[0].mxu0
        %812 = vmatprep.mubr.bf16.mxu0 0
        %813 = vmatmul.mubr.bf16.gmra.mrb[0].mxu0 %v325
        %v814 = vpop.f32.mrb[0].mxu0
        %v815 = vadd.f32 0.0, %v814
        %v816 = vpop.f32.mrb[0].mxu0
        %v817 = vpop.f32.mrb[0].mxu0
        %v818 = vadd.f32 0.0, %v817
        %v819 = vpop.f32.mrb[0].mxu0
        %820 = vmatprep.mubr.bf16.mxu0 0
        %821 = vmatmul.mubr.bf16.gmra.mrb[0].mxu0 %v328
        %v822 = vpop.f32.mrb[0].mxu0
        %v823 = vadd.f32 0.0, %v822
        %v824 = vpop.f32.mrb[0].mxu0
        %v825 = vpop.f32.mrb[0].mxu0
        %v826 = vadd.f32 0.0, %v825
        %v827 = vpop.f32.mrb[0].mxu0
        %828 = vmatprep.mubr.bf16.mxu0 0
        %829 = vmatmul.mubr.bf16.gmra.mrb[0].mxu0 %v331
        %v830 = vpop.f32.mrb[0].mxu0
        %v831 = vadd.f32 0.0, %v830
        %v832 = vpop.f32.mrb[0].mxu0
        %v833 = vpop.f32.mrb[0].mxu0
        %v834 = vadd.f32 0.0, %v833
        %v835 = vpop.f32.mrb[0].mxu0
        %836 = vmatprep.mubr.bf16.mxu0 0
        %837 = vmatmul.mubr.bf16.gmra.mrb[0].mxu0 %v334
        %v838 = vpop.f32.mrb[0].mxu0
        %v839 = vadd.f32 0.0, %v838
        %v840 = vpop.f32.mrb[0].mxu0
        %v841 = vpop.f32.mrb[0].mxu0
        %v842 = vadd.f32 0.0, %v841
        %v843 = vpop.f32.mrb[0].mxu0
        %844 = vmatprep.mubr.bf16.mxu0 0
        %845 = vmatmul.mubr.bf16.gmra.mrb[0].mxu0 %v337
        %v846 = vpop.f32.mrb[0].mxu0
        %v847 = vadd.f32 0.0, %v846
        %v848 = vpop.f32.mrb[0].mxu0
        %v849 = vpop.f32.mrb[0].mxu0
        %v850 = vadd.f32 0.0, %v849
        %v851 = vpop.f32.mrb[0].mxu0
        %852 = vmatprep.mubr.bf16.mxu0 0
        %853 = vmatmul.mubr.bf16.gmra.mrb[0].mxu0 %v695
        %v854 = vpop.f32.mrb[0].mxu0
        %v855 = vadd.f32 0.0, %v854
        %v856 = vpop.f32.mrb[0].mxu0
        %v857 = vpop.f32.mrb[0].mxu0
        %v858 = vadd.f32 0.0, %v857
        %v859 = vpop.f32.mrb[0].mxu0
        %860 = vdwg.mxu0
        %v861 = vadd.f32 %v555, %v735
        %v862 = vadd.f32 %v558, %v738
        %v863 = vadd.f32 %v563, %v743
        %v864 = vadd.f32 %v566, %v746
        %v865 = vadd.f32 %v571, %v751
        %v866 = vadd.f32 %v574, %v754
        %v867 = vadd.f32 %v579, %v759
        %v868 = vadd.f32 %v582, %v762
        %v869 = vadd.f32 %v587, %v767
        %v870 = vadd.f32 %v590, %v770
        %v871 = vadd.f32 %v595, %v775
        %v872 = vadd.f32 %v598, %v778
        %v873 = vadd.f32 %v603, %v783
        %v874 = vadd.f32 %v606, %v786
        %v875 = vadd.f32 %v611, %v791
        %v876 = vadd.f32 %v614, %v794
        %v877 = vadd.f32 %v619, %v799
        %v878 = vadd.f32 %v622, %v802
        %v879 = vadd.f32 %v627, %v807
        %v880 = vadd.f32 %v630, %v810
        %v881 = vadd.f32 %v635, %v815
        %v882 = vadd.f32 %v638, %v818
        %v883 = vadd.f32 %v643, %v823
        %v884 = vadd.f32 %v646, %v826
        %v885 = vadd.f32 %v651, %v831
        %v886 = vadd.f32 %v654, %v834
        %v887 = vadd.f32 %v659, %v839
        %v888 = vadd.f32 %v662, %v842
        %v889 = vadd.f32 %v667, %v847
        %v890 = vadd.f32 %v670, %v850
        %v891 = vadd.f32 %v675, %v855
        %v892 = vadd.f32 %v678, %v858
        %v893 = vld [vmem:[%s2] sm:$0x1]
        %v895 = vlaneseq
        %v896 = vshrl.u32 %v895, 7
        %v897 = vsub.s32 0, %v896
        %v898 = vrot.slane %v893, %v897
        %v900 = vadd.f32 %v861, %v898
        %v901 = vadd.f32 %v862, %v898
        %v902 = vadd.f32 %v863, %v898
        %v903 = vadd.f32 %v864, %v898
        %v904 = vadd.f32 %v865, %v898
        %v905 = vadd.f32 %v866, %v898
        %v906 = vadd.f32 %v867, %v898
        %v907 = vadd.f32 %v868, %v898
        %v908 = vadd.f32 %v869, %v898
        %v909 = vadd.f32 %v870, %v898
        %v910 = vadd.f32 %v871, %v898
        %v911 = vadd.f32 %v872, %v898
        %v912 = vadd.f32 %v873, %v898
        %v913 = vadd.f32 %v874, %v898
        %v914 = vadd.f32 %v875, %v898
        %v915 = vadd.f32 %v876, %v898
        %v916 = vadd.f32 %v877, %v898
        %v917 = vadd.f32 %v878, %v898
        %v918 = vadd.f32 %v879, %v898
        %v919 = vadd.f32 %v880, %v898
        %v920 = vadd.f32 %v881, %v898
        %v921 = vadd.f32 %v882, %v898
        %v922 = vadd.f32 %v883, %v898
        %v923 = vadd.f32 %v884, %v898
        %v924 = vadd.f32 %v885, %v898
        %v925 = vadd.f32 %v886, %v898
        %v926 = vadd.f32 %v887, %v898
        %v927 = vadd.f32 %v888, %v898
        %v928 = vadd.f32 %v889, %v898
        %v929 = vadd.f32 %v890, %v898
        %v930 = vadd.f32 %v891, %v898
        %v931 = vadd.f32 %v892, %v898
        %v932 = vmax.f32 %v900, 0.0
        %v933 = vmax.f32 %v901, 0.0
        %v934 = vmax.f32 %v902, 0.0
        %v935 = vmax.f32 %v903, 0.0
        %v936 = vmax.f32 %v904, 0.0
        %v937 = vmax.f32 %v905, 0.0
        %v938 = vmax.f32 %v906, 0.0
        %v939 = vmax.f32 %v907, 0.0
        %v940 = vmax.f32 %v908, 0.0
        %v941 = vmax.f32 %v909, 0.0
        %v942 = vmax.f32 %v910, 0.0
        %v943 = vmax.f32 %v911, 0.0
        %v944 = vmax.f32 %v912, 0.0
        %v945 = vmax.f32 %v913, 0.0
        %v946 = vmax.f32 %v914, 0.0
        %v947 = vmax.f32 %v915, 0.0
        %v948 = vmax.f32 %v916, 0.0
        %v949 = vmax.f32 %v917, 0.0
        %v950 = vmax.f32 %v918, 0.0
        %v951 = vmax.f32 %v919, 0.0
        %v952 = vmax.f32 %v920, 0.0
        %v953 = vmax.f32 %v921, 0.0
        %v954 = vmax.f32 %v922, 0.0
        %v955 = vmax.f32 %v923, 0.0
        %v956 = vmax.f32 %v924, 0.0
        %v957 = vmax.f32 %v925, 0.0
        %v958 = vmax.f32 %v926, 0.0
        %v959 = vmax.f32 %v927, 0.0
        %v960 = vmax.f32 %v928, 0.0
        %v961 = vmax.f32 %v929, 0.0
        %v962 = vmax.f32 %v930, 0.0
        %v963 = vmax.f32 %v931, 0.0
        %v964 = vld [vmem:[#allocation2] sm:$0x1]
        %vm965 = vcmask 261120
        %v966 = vsel %vm965, %v932, 0.0
        %v967 = vsel %vm965, %v933, 0.0
        %v968 = vadd.f32 %v966, %v967
        %v969 = vsel %vm965, %v934, 0.0
        %v970 = vadd.f32 %v968, %v969
        %v971 = vsel %vm965, %v935, 0.0
        %v972 = vadd.f32 %v970, %v971
        %v973 = vsel %vm965, %v936, 0.0
        %v974 = vadd.f32 %v972, %v973
        %v975 = vsel %vm965, %v937, 0.0
        %v976 = vadd.f32 %v974, %v975
        %v977 = vsel %vm965, %v938, 0.0
        %v978 = vadd.f32 %v976, %v977
        %v979 = vsel %vm965, %v939, 0.0
        %v980 = vadd.f32 %v978, %v979
        %v981 = vsel %vm965, %v940, 0.0
        %v982 = vadd.f32 %v980, %v981
        %v983 = vsel %vm965, %v941, 0.0
        %v984 = vadd.f32 %v982, %v983
        %v985 = vsel %vm965, %v942, 0.0
        %v986 = vadd.f32 %v984, %v985
        %v987 = vsel %vm965, %v943, 0.0
        %v988 = vadd.f32 %v986, %v987
        %v989 = vsel %vm965, %v944, 0.0
        %v990 = vadd.f32 %v988, %v989
        %v991 = vsel %vm965, %v945, 0.0
        %v992 = vadd.f32 %v990, %v991
        %v993 = vsel %vm965, %v946, 0.0
        %v994 = vadd.f32 %v992, %v993
        %v995 = vsel %vm965, %v947, 0.0
        %v996 = vadd.f32 %v994, %v995
        %v997 = vsel %vm965, %v948, 0.0
        %v998 = vadd.f32 %v996, %v997
        %v999 = vsel %vm965, %v949, 0.0
        %v1000 = vadd.f32 %v998, %v999
        %v1001 = vsel %vm965, %v950, 0.0
        %v1002 = vadd.f32 %v1000, %v1001
        %v1003 = vsel %vm965, %v951, 0.0
        %v1004 = vadd.f32 %v1002, %v1003
        %v1005 = vsel %vm965, %v952, 0.0
        %v1006 = vadd.f32 %v1004, %v1005
        %v1007 = vsel %vm965, %v953, 0.0
        %v1008 = vadd.f32 %v1006, %v1007
        %v1009 = vsel %vm965, %v954, 0.0
        %v1010 = vadd.f32 %v1008, %v1009
        %v1011 = vsel %vm965, %v955, 0.0
        %v1012 = vadd.f32 %v1010, %v1011
        %v1013 = vsel %vm965, %v956, 0.0
        %v1014 = vadd.f32 %v1012, %v1013
        %v1015 = vsel %vm965, %v957, 0.0
        %v1016 = vadd.f32 %v1014, %v1015
        %v1017 = vsel %vm965, %v958, 0.0
        %v1018 = vadd.f32 %v1016, %v1017
        %v1019 = vsel %vm965, %v959, 0.0
        %v1020 = vadd.f32 %v1018, %v1019
        %v1021 = vsel %vm965, %v960, 0.0
        %v1022 = vadd.f32 %v1020, %v1021
        %v1023 = vsel %vm965, %v961, 0.0
        %v1024 = vadd.f32 %v1022, %v1023
        %v1025 = vsel %vm965, %v962, 0.0
        %v1026 = vadd.f32 %v1024, %v1025
        %v1027 = vsel %vm965, %v963, 0.0
        %v1028 = vadd.f32 %v1026, %v1027
        %v1029 = vrot.slane %v1028, 4
        %v1030 = vadd.f32 %v1028, %v1029
        %v1031 = vrot.slane %v1030, 2
        %v1032 = vadd.f32 %v1030, %v1031
        %v1033 = vrot.slane %v1032, 1
        %v1034 = vadd.f32 %v1032, %v1033
        %v1035 = vadd.f32 %v964, %v1034
        %vm1036 = vcmask 253952
        %1037 = vst.msk [vmem:[#allocation2] sm:$0x1] %vm1036, %v1035
        %p1038 = scmp.eq.s32.totalorder %s15, 1
        // Predicated region
        $region37: #{tpu_custom_call.1} parent=31 // pred_check
          %p1039 = pneg %p1038
        $region38: #{tpu_custom_call.1} parent=31 // pred_check_branch
          %1041 = sbr.rel (%p1039) target = $region40
        $region39: #{tpu_custom_call.1} parent=31 // pred_region
          %v1042 = vld [vmem:[#allocation2] sm:$0x1]
          %v1043 = vmul.f32 %v1042, 0.001953125
          %v1044 = vmul.f32 %v1043, %v1043
          %v1045 = vsel %vm1036, %v1044, 0.0
          %1046 = vadd.xlane.f32.xlu0 %v1045
          %v1047 = vpop.xlane.xlu0 %1046
          %v1048 = vmax.f32 %v1047, 1e-24
          %v1049 = vrsqrt.pop %v1048
          %v1050 = vmul.f32 %v1043, %v1049
          %1051 = vst.msk [vmem:[#allocation3] sm:$0x1] %vm1036, %v1050
        $region40: #{tpu_custom_call.1} parent=31 // pred_fallthru
          _
        // Predicated region
        $region41: #{tpu_custom_call.1} parent=31 // pred_check
          %p1052 = pneg %p96
        $region42: #{tpu_custom_call.1} parent=31 // pred_check_branch
          %1054 = sbr.rel (%p1052) target = $region44
        $region43: #{tpu_custom_call.1} parent=31 // pred_region
          %s1056 = ssub.s32 16, 16
          %1057 = vsyncadd [#allocation4], %s1056
          %s1059 = sshll.u32 [#allocation3], 4
          %s1060 = int_to_ptr.vmem [resolvable:$true] %s1059
          %1062 = dma.vmem_to_hbm [thread:$0]  %s1060, 16, %s3, [#allocation4]
        $region44: #{tpu_custom_call.1} parent=31 // pred_fallthru
          _
        // Predicated region
        $region45: #{tpu_custom_call.1} parent=31 // pred_check
          %p1063 = pneg %p96
        $region46: #{tpu_custom_call.1} parent=31 // pred_check_branch
          %1065 = sbr.rel (%p1063) target = $region48
        $region47: #{tpu_custom_call.1} parent=31 // pred_region
          %1066 = dma.done [#allocation4], 16
        $region48: #{tpu_custom_call.1} parent=31 // pred_fallthru
          _
      $region32: #{tpu_custom_call.1} parent=5 // pred_fallthru
        _
      %p1067 = scmp.le.s32.totalorder 2, %s10
      // Predicated region
      $region49: #{tpu_custom_call.1} parent=5 // pred_check
        %p1068 = pneg %p1067
      $region50: #{tpu_custom_call.1} parent=5 // pred_check_branch
        %1070 = sbr.rel (%p1068) target = $region52
      $region51: #{tpu_custom_call.1} parent=5 // pred_region
        %s1071 = ssub.s32 %s10, 2
      $region52: #{tpu_custom_call.1} parent=5 // pred_fallthru
        _
    $region6: #{tpu_custom_call.1} parent=1 // loop_footer
      %s14 = sadd.s32 1, %s10
    $region7: #{tpu_custom_call.1} parent=1 // loop_footer_branch
      %9 = sbr.rel target = $region3
    $region8: #{tpu_custom_call.1} parent=1 // loop_exit
      _
    %1072 = vsyncpa [#allocation4], 1
    %s1073 = scalar_lea.sflag [#allocation4], 1
    %1074 = vsyncpa %s1073, 1

</llo_original>
